<compile_context>
chip_gen: v6e
topology: v6e:2x2x1
jax: 0.10.0
libtpu: 0.0.40
codegen_flags: <defaults>
</compile_context>

<pallas_src>
import numpy as np
import jax
import jax.numpy as jnp
from jax.experimental import pallas as pl
from jax.experimental.pallas import tpu as pltpu

MAX_ATOMIC_NUM = 100


def _round_up(x, m):
    return ((x + m - 1) // m) * m


def _cdiv(a, b):
    return (a + b - 1) // b


def _atom_embedding_kernel(z_ref, w_ref, o_ref):
    # z_ref: (1, TILE) int32, lane-dense atomic numbers (1-indexed)
    # w_ref: (NUM_ROWS, emb) float, full row-padded table resident in VMEM
    # o_ref: (TILE, emb) float
    idx = z_ref[...] - 1                                   # (1, TILE), 0-based rows
    num_rows = w_ref.shape[0]                              # padded to multiple of 128
    tile = z_ref.shape[1]
    # Transposed one-hot: table rows on the sublane axis, atoms on the lane axis.
    # idx (1, TILE) broadcasts along sublanes -> no lane-broadcast, no transpose.
    row_iota = jax.lax.broadcasted_iota(jnp.int32, (num_rows, tile), 0)
    onehot_t = (row_iota == idx).astype(w_ref.dtype)       # (NUM_ROWS, TILE)
    # Gather as MXU matmul, contracting the table-row axis (LHS dim 0 / trans_a).
    # HIGHEST precision keeps the f32 table exact through the MXU passes.
    h = jax.lax.dot_general(
        onehot_t, w_ref[...],
        dimension_numbers=(((0,), (0,)), ((), ())),
        preferred_element_type=jnp.float32,
        precision=jax.lax.Precision.HIGHEST,
    )                                                      # (TILE, emb) f32
    o_ref[...] = h.astype(o_ref.dtype)


def atom_embedding(Z, weights, *, tile=None):
    """Z: (nAtoms,) int with values in [1, num_emb]; weights: (num_emb, emb_size).

    Returns h: (nAtoms, emb_size), h[i] = weights[Z[i] - 1].
    """
    n_atoms = int(Z.shape[0])
    num_emb, emb_size = weights.shape
    dtype = weights.dtype
    dtype_bytes = int(jnp.dtype(dtype).itemsize)

    # --- table: zero-pad rows to a multiple of 128 (lane-aligned one-hot / MXU K).
    #     Do NOT pad further (e.g. to 256): it only doubles one-hot + compare work.
    num_rows = _round_up(num_emb, 128)
    if num_rows != num_emb:
        w = jnp.zeros((num_rows, emb_size), dtype).at[:num_emb].set(weights)
    else:
        w = weights

    # --- output rows padded only up to the sublane multiple (<= 7 extra rows).
    n_out = _round_up(n_atoms, 8)

    # --- tile selection
    if tile is None:
        # ~1 MiB output block amortizes the ~0.35 us per-grid-step overhead and
        # saturates the HBM write roofline; cap at 2048 atoms to stay well inside
        # v5e's 16 MiB default scoped-VMEM (working set ~5-7 MiB incl. MXU temps).
        tile = min(2048, max(128, (1 << 20) // max(emb_size * dtype_bytes, 1)))
        tile = min(tile, _round_up(n_out, 128))
        # Prefer >= 2 grid steps when there is enough work: v7x has two
        # TensorCores and the atom axis is "parallel"; an extra step is ~free
        # on single-TC chips.
        if n_out > 1024:
            tile = min(tile, max(512, _round_up(_cdiv(n_out, 2), 128)))
    # Tile must be a multiple of 128 (lane-dense Z block) -> also a sublane multiple.
    tile = max(128, _round_up(min(int(tile), _round_up(n_out, 128)), 128))

    grid = _cdiv(n_out, tile)

    # --- Z as a lane-dense (1, nAtoms) row: contiguous DMA, 4 B/atom of VMEM,
    #     no concatenate/copy (reshape only). Lanes past nAtoms in the last
    #     (partial) block are unspecified but only ever feed padded output rows.
    z2d = Z.astype(jnp.int32).reshape(1, n_atoms)

    cost = pl.CostEstimate(
        flops=2 * grid * tile * num_rows * emb_size,
        transcendentals=0,
        bytes_accessed=(n_atoms * 4
                        + num_rows * emb_size * dtype_bytes
                        + n_out * emb_size * dtype_bytes),
    )

    # NOTE: out-of-range Z (<1 or >num_emb) yields a zero embedding row here,
    # whereas torch.nn.Embedding would error; inputs are assumed in-range.
    h = pl.pallas_call(
        _atom_embedding_kernel,
        out_shape=jax.ShapeDtypeStruct((n_out, emb_size), dtype),
        grid_spec=pltpu.PrefetchScalarGridSpec(
            num_scalar_prefetch=0,
            grid=(grid,),
            in_specs=[
                # lane-dense Z tile, pipelined over the grid
                pl.BlockSpec((1, tile), lambda i: (0, i)),
                # full embedding table, resident in VMEM (no double-buffering)
                pl.BlockSpec(memory_space=pltpu.MemorySpace.VMEM),
            ],
            out_specs=pl.BlockSpec((tile, emb_size), lambda i: (i, 0)),
        ),
        compiler_params=pltpu.CompilerParams(
            dimension_semantics=("parallel",),
        ),
        cost_estimate=cost,
    )(z2d, w)

    # <= 7 padded rows; slice only when needed. Consumers that tolerate the
    # 8-row-aligned output should take `h` directly to avoid this copy.
    return h if n_out == n_atoms else h[:n_atoms]


if __name__ == "__main__":
    emb_size = 128

    key = jax.random.PRNGKey(0)
    k_w, k_z = jax.random.split(key)

    # torch.nn.init.uniform_(weight, a=-sqrt(3), b=sqrt(3)), deterministic here.
    bound = float(np.sqrt(3.0))
    weights = jax.random.uniform(
        k_w, (MAX_ATOMIC_NUM, emb_size), dtype=jnp.float32,
        minval=-bound, maxval=bound,
    )

    # case 1: small, non-multiple-of-8 atom count (exercises sublane padding,
    #         partial blocks, and the final slice), default auto tile.
    n_atoms = 50
    Z = jax.random.randint(k_z, (n_atoms,), 1, MAX_ATOMIC_NUM + 1, dtype=jnp.int32)
    h = jax.block_until_ready(atom_embedding(Z, weights))
    h_ref = weights[Z - 1]
    assert h.shape == (n_atoms, emb_size)
    assert jnp.allclose(h, h_ref, atol=1e-6, rtol=1e-6)

    # case 2: explicit small tile -> multi-step grid with a partial last block,
    #         exercises pipelining of the lane-dense Z / output tiles.
    n_atoms2 = 300
    Z2 = jax.random.randint(jax.random.PRNGKey(1), (n_atoms2,), 1,
                            MAX_ATOMIC_NUM + 1, dtype=jnp.int32)
    h2 = jax.block_until_ready(atom_embedding(Z2, weights, tile=128))
    assert h2.shape == (n_atoms2, emb_size)
    assert jnp.allclose(h2, weights[Z2 - 1], atol=1e-6, rtol=1e-6)

    print("KERNEL_OK")
</pallas_src>

<mosaic_0001>
module attributes {stable_mosaic.version = 11 : i64} {
  func.func @_atom_embedding_kernel(%arg0: i32, %arg1: memref<1x128xi32, #tpu.memory_space<vmem>>, %arg2: memref<128x128xf32, #tpu.memory_space<vmem>>, %arg3: memref<128x128xf32, #tpu.memory_space<vmem>>) attributes {dimension_semantics = [#tpu.dimension_semantics<parallel>], iteration_bounds = array<i64: 1>, scalar_prefetch = 0 : i64, scratch_operands = 0 : i64, tpu.core_type = #tpu.core_type<tc>, window_params = [{transform_indices = @transform_0, window_bounds = array<i64: 1, 128>}, {pipeline_mode = #tpu.pipeline_mode<synchronous>, transform_indices = @transform_1, window_bounds = array<i64: 128, 128>}, {transform_indices = @transform_2, window_bounds = array<i64: 128, 128>}]} {
    %c0 = arith.constant 0 : index
    %c0_0 = arith.constant 0 : index
    %0 = vector.load %arg1[%c0, %c0_0] : memref<1x128xi32, #tpu.memory_space<vmem>>, vector<1x128xi32>
    %c1_i32 = arith.constant 1 : i32
    %1 = vector.broadcast %c1_i32 : i32 to vector<1x128xi32>
    %2 = arith.subi %0, %1 : vector<1x128xi32>
    %3 = tpu.iota {dimensions = array<i32: 0>} : vector<128x128xi32>
    %4 = vector.broadcast %2 : vector<1x128xi32> to vector<128x128xi32>
    %5 = arith.cmpi eq, %3, %4 : vector<128x128xi32>
    %6 = arith.extui %5 : vector<128x128xi1> to vector<128x128xi32>
    %7 = arith.sitofp %6 : vector<128x128xi32> to vector<128x128xf32>
    %c0_1 = arith.constant 0 : index
    %c0_2 = arith.constant 0 : index
    %8 = vector.load %arg2[%c0_1, %c0_2] : memref<128x128xf32, #tpu.memory_space<vmem>>, vector<128x128xf32>
    %cst = arith.constant dense<0.000000e+00> : vector<128x128xf32>
    %9 = tpu.matmul %7, %8, %cst {dimension_numbers = #tpu.dot_dimension_numbers<[0], [0], [1], [1], [0, 1, 1, 1], [], []>, precision = #tpu.contract_precision<fp32>} : vector<128x128xf32>, vector<128x128xf32>, vector<128x128xf32> -> vector<128x128xf32>
    %c0_3 = arith.constant 0 : index
    %c0_4 = arith.constant 0 : index
    %10 = vector.load %arg3[%c0_3, %c0_4] : memref<128x128xf32, #tpu.memory_space<vmem>>, vector<128x128xf32>
    tpu.vector_store %arg3[%c0_3, %c0_4], %9 {strides = array<i32>} : memref<128x128xf32, #tpu.memory_space<vmem>>, vector<128x128xf32>,
    return
  }
  func.func @transform_0(%arg0: i32) -> (i32, i32) {
    %c0_i32 = arith.constant 0 : i32
    %c0_i32_0 = arith.constant 0 : i32
    return %c0_i32, %arg0 : i32, i32
  }
  func.func @transform_1(%arg0: i32) -> (i32, i32) {
    %c0_i32 = arith.constant 0 : i32
    %c0_i32_0 = arith.constant 0 : i32
    %c0_i32_1 = arith.constant 0 : i32
    return %c0_i32, %c0_i32_0 : i32, i32
  }
  func.func @transform_2(%arg0: i32) -> (i32, i32) {
    %c0_i32 = arith.constant 0 : i32
    %c0_i32_0 = arith.constant 0 : i32
    return %arg0, %c0_i32 : i32, i32
  }
}

</mosaic_0001>

<llo_original>
// kernel: tpu_custom_call.1
$region0: #{tpu_custom_call.1}
  #allocation0 [shape = 'u32[]', space=smem, size = 0x4, offset = 0x4, fixed_abs, tag = 'smem constant byte address 0x4 - core index']
  #allocation1 [shape = 'u32[144,128]{1,0:T(1,128)}', space=vmem, size = 0x12000, scoped, tag = 'internal scratch']
  %s0 = inlined_call_operand.hbm [shape: s32[1,50], index: 0, kind: input, shape index: {}]
  %s1 = inlined_call_operand.hbm [shape: f32[128,128], index: 1, kind: input, shape index: {}]
  %s2 = inlined_call_operand.hbm [shape: f32[56,128], index: 2, kind: output, shape index: {}]
  %s3 = sld [smem:[#allocation0]]
  $region26: #{tpu_custom_call.1} parent=0
    _
  %s5 = ssub.s32 1, %s3
  %s6 = scalar_select 0, %s5, %s3
  $region1: #{tpu_custom_call.1} parent=0
    #allocation2 [shape = 'u8[512]{0}', space=vmem, size = 0x400, scoped, tag = 'input window, operand 0, single buffered']
    #allocation3 [shape = 's32[1]{0}', space=sflag, size = 0x4, scoped, tag = 'scoped memory for tpu_custom_call.1']
    #allocation4 [shape = 's32[1]{0}', space=sflag, size = 0x4, scoped, tag = 'scoped memory for tpu_custom_call.1']
    #allocation5 [shape = 'u8[65536]{0}', space=vmem, size = 0x10000, scoped, tag = 'input window, operand 1, single buffered']
    #allocation6 [shape = 's32[1]{0}', space=sflag, size = 0x4, scoped, tag = 'scoped memory for tpu_custom_call.1']
    #allocation7 [shape = 'u8[65536]{0}', space=vmem, size = 0x10000, scoped, tag = 'output window, operand 0, single buffered']
    %7 = vsyncpa [#allocation3], 0
    %8 = vsyncpa [#allocation6], 0
    %9 = vsyncpa [#allocation4], 0
    // Predicated region
    $region2: #{tpu_custom_call.1} parent=1 // pred_check
      _
    $region3: #{tpu_custom_call.1} parent=1 // pred_check_branch
      %11 = sbr.rel (0) target = $region5
    $region4: #{tpu_custom_call.1} parent=1 // pred_region
      %s13 = ssub.s32 16, 16
      %14 = vsyncadd [#allocation3], %s13
      %s16 = sshll.u32 [#allocation2], 4
      %s17 = int_to_ptr.vmem [resolvable:$true] %s16
      %19 = dma.hbm_to_vmem [thread:$0]  %s0, 16, %s17, [#allocation3]
    $region5: #{tpu_custom_call.1} parent=1 // pred_fallthru
      _
    // Predicated region
    $region6: #{tpu_custom_call.1} parent=1 // pred_check
      _
    $region7: #{tpu_custom_call.1} parent=1 // pred_check_branch
      %21 = sbr.rel (0) target = $region9
    $region8: #{tpu_custom_call.1} parent=1 // pred_region
      %s23 = ssub.s32 2048, 2048
      %24 = vsyncadd [#allocation6], %s23
      %s25 = sshll.u32 [#allocation5], 4
      %s26 = int_to_ptr.vmem [resolvable:$true] %s25
      %31 = dma.hbm_to_vmem [thread:$0]  %s1, 2048, %s26, [#allocation6], 128, 128, 8
    $region9: #{tpu_custom_call.1} parent=1 // pred_fallthru
      _
    // Predicated region
    $region10: #{tpu_custom_call.1} parent=1 // pred_check
      _
    $region11: #{tpu_custom_call.1} parent=1 // pred_check_branch
      %33 = sbr.rel (0) target = $region13
    $region12: #{tpu_custom_call.1} parent=1 // pred_region
      %34 = dma.done [#allocation3], 16
    $region13: #{tpu_custom_call.1} parent=1 // pred_fallthru
      _
    // Predicated region
    $region14: #{tpu_custom_call.1} parent=1 // pred_check
      _
    $region15: #{tpu_custom_call.1} parent=1 // pred_check_branch
      %36 = sbr.rel (0) target = $region17
    $region16: #{tpu_custom_call.1} parent=1 // pred_region
      %37 = dma.done [#allocation6], 2048
    $region17: #{tpu_custom_call.1} parent=1 // pred_fallthru
      _
    %v38 = vld [vmem:[#allocation2] sm:$0x1]
    %v39 = vsub.s32 %v38, 1
    %v40 = vlaneseq
    %v41 = vshrl.u32 %v40, 7
    %v42 = vadd.s32 %v41, 8
    %v43 = vadd.s32 %v41, 16
    %v44 = vadd.s32 %v41, 24
    %v45 = vadd.s32 %v41, 32
    %v46 = vadd.s32 %v41, 40
    %v47 = vadd.s32 %v41, 48
    %v48 = vadd.s32 %v41, 56
    %v49 = vadd.s32 %v41, 64
    %v50 = vadd.s32 %v41, 72
    %v51 = vadd.s32 %v41, 80
    %v52 = vadd.s32 %v41, 88
    %v53 = vadd.s32 %v41, 96
    %v54 = vadd.s32 %v41, 104
    %v55 = vadd.s32 %v41, 112
    %v56 = vadd.s32 %v41, 120
    %v57 = vlaneseq
    %v58 = vshrl.u32 %v57, 7
    %v59 = vsub.s32 0, %v58
    %v60 = vrot.slane %v39, %v59
    %vm61 = vcmp.eq.s32.totalorder %v41, %v60
    %vm62 = vcmp.eq.s32.totalorder %v42, %v60
    %vm63 = vcmp.eq.s32.totalorder %v43, %v60
    %vm64 = vcmp.eq.s32.totalorder %v44, %v60
    %vm65 = vcmp.eq.s32.totalorder %v45, %v60
    %vm66 = vcmp.eq.s32.totalorder %v46, %v60
    %vm67 = vcmp.eq.s32.totalorder %v47, %v60
    %vm68 = vcmp.eq.s32.totalorder %v48, %v60
    %vm69 = vcmp.eq.s32.totalorder %v49, %v60
    %vm70 = vcmp.eq.s32.totalorder %v50, %v60
    %vm71 = vcmp.eq.s32.totalorder %v51, %v60
    %vm72 = vcmp.eq.s32.totalorder %v52, %v60
    %vm73 = vcmp.eq.s32.totalorder %v53, %v60
    %vm74 = vcmp.eq.s32.totalorder %v54, %v60
    %vm75 = vcmp.eq.s32.totalorder %v55, %v60
    %vm76 = vcmp.eq.s32.totalorder %v56, %v60
    %v77 = vsel %vm61, 1, 0
    %v78 = vsel %vm62, 1, 0
    %v79 = vsel %vm63, 1, 0
    %v80 = vsel %vm64, 1, 0
    %v81 = vsel %vm65, 1, 0
    %v82 = vsel %vm66, 1, 0
    %v83 = vsel %vm67, 1, 0
    %v84 = vsel %vm68, 1, 0
    %v85 = vsel %vm69, 1, 0
    %v86 = vsel %vm70, 1, 0
    %v87 = vsel %vm71, 1, 0
    %v88 = vsel %vm72, 1, 0
    %v89 = vsel %vm73, 1, 0
    %v90 = vsel %vm74, 1, 0
    %v91 = vsel %vm75, 1, 0
    %v92 = vsel %vm76, 1, 0
    %v93 = vcvt.s32.f32 %v77
    %v94 = vcvt.s32.f32 %v78
    %v95 = vcvt.s32.f32 %v79
    %v96 = vcvt.s32.f32 %v80
    %v97 = vcvt.s32.f32 %v81
    %v98 = vcvt.s32.f32 %v82
    %v99 = vcvt.s32.f32 %v83
    %v100 = vcvt.s32.f32 %v84
    %v101 = vcvt.s32.f32 %v85
    %v102 = vcvt.s32.f32 %v86
    %v103 = vcvt.s32.f32 %v87
    %v104 = vcvt.s32.f32 %v88
    %v105 = vcvt.s32.f32 %v89
    %v106 = vcvt.s32.f32 %v90
    %v107 = vcvt.s32.f32 %v91
    %v108 = vcvt.s32.f32 %v92
    %v109 = vld [vmem:[#allocation5] sm:$0xff]
    %v110 = vld [vmem:[#allocation5 + $0x8] sm:$0xff]
    %v111 = vld [vmem:[#allocation5 + $0x10] sm:$0xff]
    %v112 = vld [vmem:[#allocation5 + $0x18] sm:$0xff]
    %v113 = vld [vmem:[#allocation5 + $0x20] sm:$0xff]
    %v114 = vld [vmem:[#allocation5 + $0x28] sm:$0xff]
    %v115 = vld [vmem:[#allocation5 + $0x30] sm:$0xff]
    %v116 = vld [vmem:[#allocation5 + $0x38] sm:$0xff]
    %v117 = vld [vmem:[#allocation5 + $0x40] sm:$0xff]
    %v118 = vld [vmem:[#allocation5 + $0x48] sm:$0xff]
    %v119 = vld [vmem:[#allocation5 + $0x50] sm:$0xff]
    %v120 = vld [vmem:[#allocation5 + $0x58] sm:$0xff]
    %v121 = vld [vmem:[#allocation5 + $0x60] sm:$0xff]
    %v122 = vld [vmem:[#allocation5 + $0x68] sm:$0xff]
    %v123 = vld [vmem:[#allocation5 + $0x70] sm:$0xff]
    %v124 = vld [vmem:[#allocation5 + $0x78] sm:$0xff]
    %125 = vxpose.xlu0.b32.start [1/16] %v93, 128
    %126 = vxpose.xlu0.b32.cont [2/16] %v94, 128
    %127 = vxpose.xlu0.b32.cont [3/16] %v95, 128
    %128 = vxpose.xlu0.b32.cont [4/16] %v96, 128
    %129 = vxpose.xlu0.b32.cont [5/16] %v97, 128
    %130 = vxpose.xlu0.b32.cont [6/16] %v98, 128
    %131 = vxpose.xlu0.b32.cont [7/16] %v99, 128
    %132 = vxpose.xlu0.b32.cont [8/16] %v100, 128
    %133 = vxpose.xlu0.b32.cont [9/16] %v101, 128
    %134 = vxpose.xlu0.b32.cont [10/16] %v102, 128
    %135 = vxpose.xlu0.b32.cont [11/16] %v103, 128
    %136 = vxpose.xlu0.b32.cont [12/16] %v104, 128
    %137 = vxpose.xlu0.b32.cont [13/16] %v105, 128
    %138 = vxpose.xlu0.b32.cont [14/16] %v106, 128
    %139 = vxpose.xlu0.b32.cont [15/16] %v107, 128
    %140 = vxpose.xlu0.b32.end [16/16] %v108, 128
    %v141 = vpop.trf.xlu0
    %v142 = vpop.trf.xlu0
    %v143 = vpop.trf.xlu0
    %v144 = vpop.trf.xlu0
    %v145 = vpop.trf.xlu0
    %v146 = vpop.trf.xlu0
    %v147 = vpop.trf.xlu0
    %v148 = vpop.trf.xlu0
    %v149 = vpop.trf.xlu0
    %v150 = vpop.trf.xlu0
    %v151 = vpop.trf.xlu0
    %v152 = vpop.trf.xlu0
    %v153 = vpop.trf.xlu0
    %v154 = vpop.trf.xlu0
    %v155 = vpop.trf.xlu0
    %v156 = vpop.trf.xlu0
    %157 = vmatprep.subr.mxu0 0.0
    %v158 = vand.u32 %v124, 4294901760
    %159 = vmatpush1.msra.mxu0 %v158
    %160 = vmatprep.subr.mxu0 0.0
    %v161 = vand.u32 %v123, 4294901760
    %162 = vmatpush1.msra.mxu0 %v161
    %163 = vmatprep.subr.mxu0 0.0
    %v164 = vand.u32 %v122, 4294901760
    %165 = vmatpush1.msra.mxu0 %v164
    %166 = vmatprep.subr.mxu0 0.0
    %v167 = vand.u32 %v121, 4294901760
    %168 = vmatpush1.msra.mxu0 %v167
    %169 = vmatprep.subr.mxu0 0.0
    %v170 = vand.u32 %v120, 4294901760
    %171 = vmatpush1.msra.mxu0 %v170
    %172 = vmatprep.subr.mxu0 0.0
    %v173 = vand.u32 %v119, 4294901760
    %174 = vmatpush1.msra.mxu0 %v173
    %175 = vmatprep.subr.mxu0 0.0
    %v176 = vand.u32 %v118, 4294901760
    %177 = vmatpush1.msra.mxu0 %v176
    %178 = vmatprep.subr.mxu0 0.0
    %v179 = vand.u32 %v117, 4294901760
    %180 = vmatpush1.msra.mxu0 %v179
    %181 = vmatprep.subr.mxu0 0.0
    %v182 = vand.u32 %v116, 4294901760
    %183 = vmatpush1.msra.mxu0 %v182
    %184 = vmatprep.subr.mxu0 0.0
    %v185 = vand.u32 %v115, 4294901760
    %186 = vmatpush1.msra.mxu0 %v185
    %187 = vmatprep.subr.mxu0 0.0
    %v188 = vand.u32 %v114, 4294901760
    %189 = vmatpush1.msra.mxu0 %v188
    %190 = vmatprep.subr.mxu0 0.0
    %v191 = vand.u32 %v113, 4294901760
    %192 = vmatpush1.msra.mxu0 %v191
    %193 = vmatprep.subr.mxu0 0.0
    %v194 = vand.u32 %v112, 4294901760
    %195 = vmatpush1.msra.mxu0 %v194
    %196 = vmatprep.subr.mxu0 0.0
    %v197 = vand.u32 %v111, 4294901760
    %198 = vmatpush1.msra.mxu0 %v197
    %199 = vmatprep.subr.mxu0 0.0
    %v200 = vand.u32 %v110, 4294901760
    %201 = vmatpush1.msra.mxu0 %v200
    %202 = vmatprep.subr.mxu0 0.0
    %v203 = vand.u32 %v109, 4294901760
    %204 = vmatpush1.msra.mxu0 %v203
    %205 = vmatprep.subr.mxu0 0.0
    %206 = vmatpush2.msra.mxu0 0.0
    %207 = vmatprep.subr.mxu0 0.0
    %208 = vmatpush2.msra.mxu0 0.0
    %209 = vmatprep.subr.mxu0 0.0
    %210 = vmatpush2.msra.mxu0 0.0
    %211 = vmatprep.subr.mxu0 0.0
    %212 = vmatpush2.msra.mxu0 0.0
    %213 = vmatprep.subr.mxu0 0.0
    %214 = vmatpush2.msra.mxu0 0.0
    %215 = vmatprep.subr.mxu0 0.0
    %216 = vmatpush2.msra.mxu0 0.0
    %217 = vmatprep.subr.mxu0 0.0
    %218 = vmatpush2.msra.mxu0 0.0
    %219 = vmatprep.subr.mxu0 0.0
    %220 = vmatpush2.msra.mxu0 0.0
    %221 = vmatprep.subr.mxu0 0.0
    %222 = vmatpush2.msra.mxu0 0.0
    %223 = vmatprep.subr.mxu0 0.0
    %224 = vmatpush2.msra.mxu0 0.0
    %225 = vmatprep.subr.mxu0 0.0
    %226 = vmatpush2.msra.mxu0 0.0
    %227 = vmatprep.subr.mxu0 0.0
    %228 = vmatpush2.msra.mxu0 0.0
    %229 = vmatprep.subr.mxu0 0.0
    %230 = vmatpush2.msra.mxu0 0.0
    %231 = vmatprep.subr.mxu0 0.0
    %232 = vmatpush2.msra.mxu0 0.0
    %233 = vmatprep.subr.mxu0 0.0
    %234 = vmatpush2.msra.mxu0 0.0
    %235 = vmatprep.subr.mxu0 0.0
    %236 = vmatpush2.msra.mxu0 0.0
    %237 = vmatprep.mubr.f32.mxu0 0.0
    %v238 = vand.u32 %v141, 4294901760
    %v239 = vsub.f32 %v141, %v238
    %v240 = vand.u32 %v239, 4294901760
    %v241 = vsub.f32 %v239, %v240
    %v242 = vand.u32 %v241, 4294901760
    %243 = vmatmul.mubr.f32.gmra.mxu0 %v242
    %v244 = vpop.f32.mrf.mxu0
    %v245 = vadd.f32 0.0, %v244
    %v246 = vpop.f32.mrf.mxu0
    %247 = vmatprep.mubr.f32.mxu0 0.0
    %v248 = vand.u32 %v142, 4294901760
    %v249 = vsub.f32 %v142, %v248
    %v250 = vand.u32 %v249, 4294901760
    %v251 = vsub.f32 %v249, %v250
    %v252 = vand.u32 %v251, 4294901760
    %253 = vmatmul.mubr.f32.gmra.mxu0 %v252
    %v254 = vpop.f32.mrf.mxu0
    %v255 = vadd.f32 0.0, %v254
    %v256 = vpop.f32.mrf.mxu0
    %257 = vmatprep.mubr.f32.mxu0 0.0
    %v258 = vand.u32 %v143, 4294901760
    %v259 = vsub.f32 %v143, %v258
    %v260 = vand.u32 %v259, 4294901760
    %v261 = vsub.f32 %v259, %v260
    %v262 = vand.u32 %v261, 4294901760
    %263 = vmatmul.mubr.f32.gmra.mxu0 %v262
    %v264 = vpop.f32.mrf.mxu0
    %v265 = vadd.f32 0.0, %v264
    %v266 = vpop.f32.mrf.mxu0
    %267 = vmatprep.mubr.f32.mxu0 0.0
    %v268 = vand.u32 %v144, 4294901760
    %v269 = vsub.f32 %v144, %v268
    %v270 = vand.u32 %v269, 4294901760
    %v271 = vsub.f32 %v269, %v270
    %v272 = vand.u32 %v271, 4294901760
    %273 = vmatmul.mubr.f32.gmra.mxu0 %v272
    %v274 = vpop.f32.mrf.mxu0
    %v275 = vadd.f32 0.0, %v274
    %v276 = vpop.f32.mrf.mxu0
    %277 = vmatprep.mubr.f32.mxu0 0.0
    %v278 = vand.u32 %v145, 4294901760
    %v279 = vsub.f32 %v145, %v278
    %v280 = vand.u32 %v279, 4294901760
    %v281 = vsub.f32 %v279, %v280
    %v282 = vand.u32 %v281, 4294901760
    %283 = vmatmul.mubr.f32.gmra.mxu0 %v282
    %v284 = vpop.f32.mrf.mxu0
    %v285 = vadd.f32 0.0, %v284
    %v286 = vpop.f32.mrf.mxu0
    %287 = vmatprep.mubr.f32.mxu0 0.0
    %v288 = vand.u32 %v146, 4294901760
    %v289 = vsub.f32 %v146, %v288
    %v290 = vand.u32 %v289, 4294901760
    %v291 = vsub.f32 %v289, %v290
    %v292 = vand.u32 %v291, 4294901760
    %293 = vmatmul.mubr.f32.gmra.mxu0 %v292
    %v294 = vpop.f32.mrf.mxu0
    %v295 = vadd.f32 0.0, %v294
    %v296 = vpop.f32.mrf.mxu0
    %297 = vmatprep.mubr.f32.mxu0 0.0
    %v298 = vand.u32 %v147, 4294901760
    %v299 = vsub.f32 %v147, %v298
    %v300 = vand.u32 %v299, 4294901760
    %v301 = vsub.f32 %v299, %v300
    %v302 = vand.u32 %v301, 4294901760
    %303 = vmatmul.mubr.f32.gmra.mxu0 %v302
    %v304 = vpop.f32.mrf.mxu0
    %v305 = vadd.f32 0.0, %v304
    %v306 = vpop.f32.mrf.mxu0
    %307 = vmatprep.mubr.f32.mxu0 0.0
    %v308 = vand.u32 %v148, 4294901760
    %v309 = vsub.f32 %v148, %v308
    %v310 = vand.u32 %v309, 4294901760
    %v311 = vsub.f32 %v309, %v310
    %v312 = vand.u32 %v311, 4294901760
    %313 = vmatmul.mubr.f32.gmra.mxu0 %v312
    %v314 = vpop.f32.mrf.mxu0
    %v315 = vadd.f32 0.0, %v314
    %v316 = vpop.f32.mrf.mxu0
    %317 = vmatprep.mubr.f32.mxu0 0.0
    %v318 = vand.u32 %v149, 4294901760
    %v319 = vsub.f32 %v149, %v318
    %v320 = vand.u32 %v319, 4294901760
    %v321 = vsub.f32 %v319, %v320
    %v322 = vand.u32 %v321, 4294901760
    %323 = vmatmul.mubr.f32.gmra.mxu0 %v322
    %v324 = vpop.f32.mrf.mxu0
    %v325 = vadd.f32 0.0, %v324
    %v326 = vpop.f32.mrf.mxu0
    %327 = vmatprep.mubr.f32.mxu0 0.0
    %v328 = vand.u32 %v150, 4294901760
    %v329 = vsub.f32 %v150, %v328
    %v330 = vand.u32 %v329, 4294901760
    %v331 = vsub.f32 %v329, %v330
    %v332 = vand.u32 %v331, 4294901760
    %333 = vmatmul.mubr.f32.gmra.mxu0 %v332
    %v334 = vpop.f32.mrf.mxu0
    %v335 = vadd.f32 0.0, %v334
    %v336 = vpop.f32.mrf.mxu0
    %337 = vmatprep.mubr.f32.mxu0 0.0
    %v338 = vand.u32 %v151, 4294901760
    %v339 = vsub.f32 %v151, %v338
    %v340 = vand.u32 %v339, 4294901760
    %v341 = vsub.f32 %v339, %v340
    %v342 = vand.u32 %v341, 4294901760
    %343 = vmatmul.mubr.f32.gmra.mxu0 %v342
    %v344 = vpop.f32.mrf.mxu0
    %v345 = vadd.f32 0.0, %v344
    %v346 = vpop.f32.mrf.mxu0
    %347 = vmatprep.mubr.f32.mxu0 0.0
    %v348 = vand.u32 %v152, 4294901760
    %v349 = vsub.f32 %v152, %v348
    %v350 = vand.u32 %v349, 4294901760
    %v351 = vsub.f32 %v349, %v350
    %v352 = vand.u32 %v351, 4294901760
    %353 = vmatmul.mubr.f32.gmra.mxu0 %v352
    %v354 = vpop.f32.mrf.mxu0
    %v355 = vadd.f32 0.0, %v354
    %v356 = vpop.f32.mrf.mxu0
    %357 = vmatprep.mubr.f32.mxu0 0.0
    %v358 = vand.u32 %v153, 4294901760
    %v359 = vsub.f32 %v153, %v358
    %v360 = vand.u32 %v359, 4294901760
    %v361 = vsub.f32 %v359, %v360
    %v362 = vand.u32 %v361, 4294901760
    %363 = vmatmul.mubr.f32.gmra.mxu0 %v362
    %v364 = vpop.f32.mrf.mxu0
    %v365 = vadd.f32 0.0, %v364
    %v366 = vpop.f32.mrf.mxu0
    %367 = vmatprep.mubr.f32.mxu0 0.0
    %v368 = vand.u32 %v154, 4294901760
    %v369 = vsub.f32 %v154, %v368
    %v370 = vand.u32 %v369, 4294901760
    %v371 = vsub.f32 %v369, %v370
    %v372 = vand.u32 %v371, 4294901760
    %373 = vmatmul.mubr.f32.gmra.mxu0 %v372
    %v374 = vpop.f32.mrf.mxu0
    %v375 = vadd.f32 0.0, %v374
    %v376 = vpop.f32.mrf.mxu0
    %377 = vmatprep.mubr.f32.mxu0 0.0
    %v378 = vand.u32 %v155, 4294901760
    %v379 = vsub.f32 %v155, %v378
    %v380 = vand.u32 %v379, 4294901760
    %v381 = vsub.f32 %v379, %v380
    %v382 = vand.u32 %v381, 4294901760
    %383 = vmatmul.mubr.f32.gmra.mxu0 %v382
    %v384 = vpop.f32.mrf.mxu0
    %v385 = vadd.f32 0.0, %v384
    %v386 = vpop.f32.mrf.mxu0
    %387 = vmatprep.mubr.f32.mxu0 0.0
    %v388 = vand.u32 %v156, 4294901760
    %v389 = vsub.f32 %v156, %v388
    %v390 = vand.u32 %v389, 4294901760
    %v391 = vsub.f32 %v389, %v390
    %v392 = vand.u32 %v391, 4294901760
    %393 = vmatmul.mubr.f32.gmra.mxu0 %v392
    %v394 = vpop.f32.mrf.mxu0
    %v395 = vadd.f32 0.0, %v394
    %v396 = vpop.f32.mrf.mxu0
    %397 = vdwg.mxu0
    %398 = vmatprep.subr.mxu0 0.0
    %v399 = vand.u32 %v124, 4294901760
    %v400 = vsub.f32 %v124, %v399
    %v401 = vand.u32 %v400, 4294901760
    %v402 = vsub.f32 %v400, %v401
    %v403 = vand.u32 %v402, 4294901760
    %404 = vmatpush1.msra.mxu0 %v403
    %405 = vmatprep.subr.mxu0 0.0
    %v406 = vand.u32 %v123, 4294901760
    %v407 = vsub.f32 %v123, %v406
    %v408 = vand.u32 %v407, 4294901760
    %v409 = vsub.f32 %v407, %v408
    %v410 = vand.u32 %v409, 4294901760
    %411 = vmatpush1.msra.mxu0 %v410
    %412 = vmatprep.subr.mxu0 0.0
    %v413 = vand.u32 %v122, 4294901760
    %v414 = vsub.f32 %v122, %v413
    %v415 = vand.u32 %v414, 4294901760
    %v416 = vsub.f32 %v414, %v415
    %v417 = vand.u32 %v416, 4294901760
    %418 = vmatpush1.msra.mxu0 %v417
    %419 = vmatprep.subr.mxu0 0.0
    %v420 = vand.u32 %v121, 4294901760
    %v421 = vsub.f32 %v121, %v420
    %v422 = vand.u32 %v421, 4294901760
    %v423 = vsub.f32 %v421, %v422
    %v424 = vand.u32 %v423, 4294901760
    %425 = vmatpush1.msra.mxu0 %v424
    %426 = vmatprep.subr.mxu0 0.0
    %v427 = vand.u32 %v120, 4294901760
    %v428 = vsub.f32 %v120, %v427
    %v429 = vand.u32 %v428, 4294901760
    %v430 = vsub.f32 %v428, %v429
    %v431 = vand.u32 %v430, 4294901760
    %432 = vmatpush1.msra.mxu0 %v431
    %433 = vmatprep.subr.mxu0 0.0
    %v434 = vand.u32 %v119, 4294901760
    %v435 = vsub.f32 %v119, %v434
    %v436 = vand.u32 %v435, 4294901760
    %v437 = vsub.f32 %v435, %v436
    %v438 = vand.u32 %v437, 4294901760
    %439 = vmatpush1.msra.mxu0 %v438
    %440 = vmatprep.subr.mxu0 0.0
    %v441 = vand.u32 %v118, 4294901760
    %v442 = vsub.f32 %v118, %v441
    %v443 = vand.u32 %v442, 4294901760
    %v444 = vsub.f32 %v442, %v443
    %v445 = vand.u32 %v444, 4294901760
    %446 = vmatpush1.msra.mxu0 %v445
    %447 = vmatprep.subr.mxu0 0.0
    %v448 = vand.u32 %v117, 4294901760
    %v449 = vsub.f32 %v117, %v448
    %v450 = vand.u32 %v449, 4294901760
    %v451 = vsub.f32 %v449, %v450
    %v452 = vand.u32 %v451, 4294901760
    %453 = vmatpush1.msra.mxu0 %v452
    %454 = vmatprep.subr.mxu0 0.0
    %v455 = vand.u32 %v116, 4294901760
    %v456 = vsub.f32 %v116, %v455
    %v457 = vand.u32 %v456, 4294901760
    %v458 = vsub.f32 %v456, %v457
    %v459 = vand.u32 %v458, 4294901760
    %460 = vmatpush1.msra.mxu0 %v459
    %461 = vmatprep.subr.mxu0 0.0
    %v462 = vand.u32 %v115, 4294901760
    %v463 = vsub.f32 %v115, %v462
    %v464 = vand.u32 %v463, 4294901760
    %v465 = vsub.f32 %v463, %v464
    %v466 = vand.u32 %v465, 4294901760
    %467 = vmatpush1.msra.mxu0 %v466
    %468 = vmatprep.subr.mxu0 0.0
    %v469 = vand.u32 %v114, 4294901760
    %v470 = vsub.f32 %v114, %v469
    %v471 = vand.u32 %v470, 4294901760
    %v472 = vsub.f32 %v470, %v471
    %v473 = vand.u32 %v472, 4294901760
    %474 = vmatpush1.msra.mxu0 %v473
    %475 = vmatprep.subr.mxu0 0.0
    %v476 = vand.u32 %v113, 4294901760
    %v477 = vsub.f32 %v113, %v476
    %v478 = vand.u32 %v477, 4294901760
    %v479 = vsub.f32 %v477, %v478
    %v480 = vand.u32 %v479, 4294901760
    %481 = vmatpush1.msra.mxu0 %v480
    %482 = vmatprep.subr.mxu0 0.0
    %v483 = vand.u32 %v112, 4294901760
    %v484 = vsub.f32 %v112, %v483
    %v485 = vand.u32 %v484, 4294901760
    %v486 = vsub.f32 %v484, %v485
    %v487 = vand.u32 %v486, 4294901760
    %488 = vmatpush1.msra.mxu0 %v487
    %489 = vmatprep.subr.mxu0 0.0
    %v490 = vand.u32 %v111, 4294901760
    %v491 = vsub.f32 %v111, %v490
    %v492 = vand.u32 %v491, 4294901760
    %v493 = vsub.f32 %v491, %v492
    %v494 = vand.u32 %v493, 4294901760
    %495 = vmatpush1.msra.mxu0 %v494
    %496 = vmatprep.subr.mxu0 0.0
    %v497 = vand.u32 %v110, 4294901760
    %v498 = vsub.f32 %v110, %v497
    %v499 = vand.u32 %v498, 4294901760
    %v500 = vsub.f32 %v498, %v499
    %v501 = vand.u32 %v500, 4294901760
    %502 = vmatpush1.msra.mxu0 %v501
    %503 = vmatprep.subr.mxu0 0.0
    %v504 = vand.u32 %v109, 4294901760
    %v505 = vsub.f32 %v109, %v504
    %v506 = vand.u32 %v505, 4294901760
    %v507 = vsub.f32 %v505, %v506
    %v508 = vand.u32 %v507, 4294901760
    %509 = vmatpush1.msra.mxu0 %v508
    %510 = vmatprep.subr.mxu0 0.0
    %511 = vmatpush2.msra.mxu0 0.0
    %512 = vmatprep.subr.mxu0 0.0
    %513 = vmatpush2.msra.mxu0 0.0
    %514 = vmatprep.subr.mxu0 0.0
    %515 = vmatpush2.msra.mxu0 0.0
    %516 = vmatprep.subr.mxu0 0.0
    %517 = vmatpush2.msra.mxu0 0.0
    %518 = vmatprep.subr.mxu0 0.0
    %519 = vmatpush2.msra.mxu0 0.0
    %520 = vmatprep.subr.mxu0 0.0
    %521 = vmatpush2.msra.mxu0 0.0
    %522 = vmatprep.subr.mxu0 0.0
    %523 = vmatpush2.msra.mxu0 0.0
    %524 = vmatprep.subr.mxu0 0.0
    %525 = vmatpush2.msra.mxu0 0.0
    %526 = vmatprep.subr.mxu0 0.0
    %527 = vmatpush2.msra.mxu0 0.0
    %528 = vmatprep.subr.mxu0 0.0
    %529 = vmatpush2.msra.mxu0 0.0
    %530 = vmatprep.subr.mxu0 0.0
    %531 = vmatpush2.msra.mxu0 0.0
    %532 = vmatprep.subr.mxu0 0.0
    %533 = vmatpush2.msra.mxu0 0.0
    %534 = vmatprep.subr.mxu0 0.0
    %535 = vmatpush2.msra.mxu0 0.0
    %536 = vmatprep.subr.mxu0 0.0
    %537 = vmatpush2.msra.mxu0 0.0
    %538 = vmatprep.subr.mxu0 0.0
    %539 = vmatpush2.msra.mxu0 0.0
    %540 = vmatprep.subr.mxu0 0.0
    %541 = vmatpush2.msra.mxu0 0.0
    %542 = vmatprep.mubr.f32.mxu0 0.0
    %v543 = vand.u32 %v141, 4294901760
    %544 = vmatmul.mubr.f32.gmra.mxu0 %v543
    %v545 = vpop.f32.mrf.mxu0
    %v546 = vadd.f32 %v245, %v545
    %v547 = vpop.f32.mrf.mxu0
    %548 = vmatprep.mubr.f32.mxu0 0.0
    %v549 = vand.u32 %v142, 4294901760
    %550 = vmatmul.mubr.f32.gmra.mxu0 %v549
    %v551 = vpop.f32.mrf.mxu0
    %v552 = vadd.f32 %v255, %v551
    %v553 = vpop.f32.mrf.mxu0
    %554 = vmatprep.mubr.f32.mxu0 0.0
    %v555 = vand.u32 %v143, 4294901760
    %556 = vmatmul.mubr.f32.gmra.mxu0 %v555
    %v557 = vpop.f32.mrf.mxu0
    %v558 = vadd.f32 %v265, %v557
    %v559 = vpop.f32.mrf.mxu0
    %560 = vmatprep.mubr.f32.mxu0 0.0
    %v561 = vand.u32 %v144, 4294901760
    %562 = vmatmul.mubr.f32.gmra.mxu0 %v561
    %v563 = vpop.f32.mrf.mxu0
    %v564 = vadd.f32 %v275, %v563
    %v565 = vpop.f32.mrf.mxu0
    %566 = vmatprep.mubr.f32.mxu0 0.0
    %v567 = vand.u32 %v145, 4294901760
    %568 = vmatmul.mubr.f32.gmra.mxu0 %v567
    %v569 = vpop.f32.mrf.mxu0
    %v570 = vadd.f32 %v285, %v569
    %v571 = vpop.f32.mrf.mxu0
    %572 = vmatprep.mubr.f32.mxu0 0.0
    %v573 = vand.u32 %v146, 4294901760
    %574 = vmatmul.mubr.f32.gmra.mxu0 %v573
    %v575 = vpop.f32.mrf.mxu0
    %v576 = vadd.f32 %v295, %v575
    %v577 = vpop.f32.mrf.mxu0
    %578 = vmatprep.mubr.f32.mxu0 0.0
    %v579 = vand.u32 %v147, 4294901760
    %580 = vmatmul.mubr.f32.gmra.mxu0 %v579
    %v581 = vpop.f32.mrf.mxu0
    %v582 = vadd.f32 %v305, %v581
    %v583 = vpop.f32.mrf.mxu0
    %584 = vmatprep.mubr.f32.mxu0 0.0
    %v585 = vand.u32 %v148, 4294901760
    %586 = vmatmul.mubr.f32.gmra.mxu0 %v585
    %v587 = vpop.f32.mrf.mxu0
    %v588 = vadd.f32 %v315, %v587
    %v589 = vpop.f32.mrf.mxu0
    %590 = vmatprep.mubr.f32.mxu0 0.0
    %v591 = vand.u32 %v149, 4294901760
    %592 = vmatmul.mubr.f32.gmra.mxu0 %v591
    %v593 = vpop.f32.mrf.mxu0
    %v594 = vadd.f32 %v325, %v593
    %v595 = vpop.f32.mrf.mxu0
    %596 = vmatprep.mubr.f32.mxu0 0.0
    %v597 = vand.u32 %v150, 4294901760
    %598 = vmatmul.mubr.f32.gmra.mxu0 %v597
    %v599 = vpop.f32.mrf.mxu0
    %v600 = vadd.f32 %v335, %v599
    %v601 = vpop.f32.mrf.mxu0
    %602 = vmatprep.mubr.f32.mxu0 0.0
    %v603 = vand.u32 %v151, 4294901760
    %604 = vmatmul.mubr.f32.gmra.mxu0 %v603
    %v605 = vpop.f32.mrf.mxu0
    %v606 = vadd.f32 %v345, %v605
    %v607 = vpop.f32.mrf.mxu0
    %608 = vmatprep.mubr.f32.mxu0 0.0
    %v609 = vand.u32 %v152, 4294901760
    %610 = vmatmul.mubr.f32.gmra.mxu0 %v609
    %v611 = vpop.f32.mrf.mxu0
    %v612 = vadd.f32 %v355, %v611
    %v613 = vpop.f32.mrf.mxu0
    %614 = vmatprep.mubr.f32.mxu0 0.0
    %v615 = vand.u32 %v153, 4294901760
    %616 = vmatmul.mubr.f32.gmra.mxu0 %v615
    %v617 = vpop.f32.mrf.mxu0
    %v618 = vadd.f32 %v365, %v617
    %v619 = vpop.f32.mrf.mxu0
    %620 = vmatprep.mubr.f32.mxu0 0.0
    %v621 = vand.u32 %v154, 4294901760
    %622 = vmatmul.mubr.f32.gmra.mxu0 %v621
    %v623 = vpop.f32.mrf.mxu0
    %v624 = vadd.f32 %v375, %v623
    %v625 = vpop.f32.mrf.mxu0
    %626 = vmatprep.mubr.f32.mxu0 0.0
    %v627 = vand.u32 %v155, 4294901760
    %628 = vmatmul.mubr.f32.gmra.mxu0 %v627
    %v629 = vpop.f32.mrf.mxu0
    %v630 = vadd.f32 %v385, %v629
    %v631 = vpop.f32.mrf.mxu0
    %632 = vmatprep.mubr.f32.mxu0 0.0
    %v633 = vand.u32 %v156, 4294901760
    %634 = vmatmul.mubr.f32.gmra.mxu0 %v633
    %v635 = vpop.f32.mrf.mxu0
    %v636 = vadd.f32 %v395, %v635
    %v637 = vpop.f32.mrf.mxu0
    %638 = vdwg.mxu0
    %639 = vmatprep.subr.mxu0 0.0
    %v640 = vand.u32 %v124, 4294901760
    %v641 = vsub.f32 %v124, %v640
    %642 = vmatpush1.msra.mxu0 %v641
    %643 = vmatprep.subr.mxu0 0.0
    %v644 = vand.u32 %v123, 4294901760
    %v645 = vsub.f32 %v123, %v644
    %646 = vmatpush1.msra.mxu0 %v645
    %647 = vmatprep.subr.mxu0 0.0
    %v648 = vand.u32 %v122, 4294901760
    %v649 = vsub.f32 %v122, %v648
    %650 = vmatpush1.msra.mxu0 %v649
    %651 = vmatprep.subr.mxu0 0.0
    %v652 = vand.u32 %v121, 4294901760
    %v653 = vsub.f32 %v121, %v652
    %654 = vmatpush1.msra.mxu0 %v653
    %655 = vmatprep.subr.mxu0 0.0
    %v656 = vand.u32 %v120, 4294901760
    %v657 = vsub.f32 %v120, %v656
    %658 = vmatpush1.msra.mxu0 %v657
    %659 = vmatprep.subr.mxu0 0.0
    %v660 = vand.u32 %v119, 4294901760
    %v661 = vsub.f32 %v119, %v660
    %662 = vmatpush1.msra.mxu0 %v661
    %663 = vmatprep.subr.mxu0 0.0
    %v664 = vand.u32 %v118, 4294901760
    %v665 = vsub.f32 %v118, %v664
    %666 = vmatpush1.msra.mxu0 %v665
    %667 = vmatprep.subr.mxu0 0.0
    %v668 = vand.u32 %v117, 4294901760
    %v669 = vsub.f32 %v117, %v668
    %670 = vmatpush1.msra.mxu0 %v669
    %671 = vmatprep.subr.mxu0 0.0
    %v672 = vand.u32 %v116, 4294901760
    %v673 = vsub.f32 %v116, %v672
    %674 = vmatpush1.msra.mxu0 %v673
    %675 = vmatprep.subr.mxu0 0.0
    %v676 = vand.u32 %v115, 4294901760
    %v677 = vsub.f32 %v115, %v676
    %678 = vmatpush1.msra.mxu0 %v677
    %679 = vmatprep.subr.mxu0 0.0
    %v680 = vand.u32 %v114, 4294901760
    %v681 = vsub.f32 %v114, %v680
    %682 = vmatpush1.msra.mxu0 %v681
    %683 = vmatprep.subr.mxu0 0.0
    %v684 = vand.u32 %v113, 4294901760
    %v685 = vsub.f32 %v113, %v684
    %686 = vmatpush1.msra.mxu0 %v685
    %687 = vmatprep.subr.mxu0 0.0
    %v688 = vand.u32 %v112, 4294901760
    %v689 = vsub.f32 %v112, %v688
    %690 = vmatpush1.msra.mxu0 %v689
    %691 = vmatprep.subr.mxu0 0.0
    %v692 = vand.u32 %v111, 4294901760
    %v693 = vsub.f32 %v111, %v692
    %694 = vmatpush1.msra.mxu0 %v693
    %695 = vmatprep.subr.mxu0 0.0
    %v696 = vand.u32 %v110, 4294901760
    %v697 = vsub.f32 %v110, %v696
    %698 = vmatpush1.msra.mxu0 %v697
    %699 = vmatprep.subr.mxu0 0.0
    %v700 = vand.u32 %v109, 4294901760
    %v701 = vsub.f32 %v109, %v700
    %702 = vmatpush1.msra.mxu0 %v701
    %703 = vmatprep.subr.mxu0 0.0
    %704 = vmatpush2.msra.mxu0 0.0
    %705 = vmatprep.subr.mxu0 0.0
    %706 = vmatpush2.msra.mxu0 0.0
    %707 = vmatprep.subr.mxu0 0.0
    %708 = vmatpush2.msra.mxu0 0.0
    %709 = vmatprep.subr.mxu0 0.0
    %710 = vmatpush2.msra.mxu0 0.0
    %711 = vmatprep.subr.mxu0 0.0
    %712 = vmatpush2.msra.mxu0 0.0
    %713 = vmatprep.subr.mxu0 0.0
    %714 = vmatpush2.msra.mxu0 0.0
    %715 = vmatprep.subr.mxu0 0.0
    %716 = vmatpush2.msra.mxu0 0.0
    %717 = vmatprep.subr.mxu0 0.0
    %718 = vmatpush2.msra.mxu0 0.0
    %719 = vmatprep.subr.mxu0 0.0
    %720 = vmatpush2.msra.mxu0 0.0
    %721 = vmatprep.subr.mxu0 0.0
    %722 = vmatpush2.msra.mxu0 0.0
    %723 = vmatprep.subr.mxu0 0.0
    %724 = vmatpush2.msra.mxu0 0.0
    %725 = vmatprep.subr.mxu0 0.0
    %726 = vmatpush2.msra.mxu0 0.0
    %727 = vmatprep.subr.mxu0 0.0
    %728 = vmatpush2.msra.mxu0 0.0
    %729 = vmatprep.subr.mxu0 0.0
    %730 = vmatpush2.msra.mxu0 0.0
    %731 = vmatprep.subr.mxu0 0.0
    %732 = vmatpush2.msra.mxu0 0.0
    %733 = vmatprep.subr.mxu0 0.0
    %734 = vmatpush2.msra.mxu0 0.0
    %735 = vmatprep.mubr.f32.mxu0 0.0
    %v736 = vand.u32 %v141, 4294901760
    %v737 = vsub.f32 %v141, %v736
    %738 = vmatmul.mubr.f32.gmra.mxu0 %v737
    %v739 = vpop.f32.mrf.mxu0
    %v740 = vadd.f32 %v546, %v739
    %v741 = vpop.f32.mrf.mxu0
    %742 = vmatprep.mubr.f32.mxu0 0.0
    %v743 = vand.u32 %v142, 4294901760
    %v744 = vsub.f32 %v142, %v743
    %745 = vmatmul.mubr.f32.gmra.mxu0 %v744
    %v746 = vpop.f32.mrf.mxu0
    %v747 = vadd.f32 %v552, %v746
    %v748 = vpop.f32.mrf.mxu0
    %749 = vmatprep.mubr.f32.mxu0 0.0
    %v750 = vand.u32 %v143, 4294901760
    %v751 = vsub.f32 %v143, %v750
    %752 = vmatmul.mubr.f32.gmra.mxu0 %v751
    %v753 = vpop.f32.mrf.mxu0
    %v754 = vadd.f32 %v558, %v753
    %v755 = vpop.f32.mrf.mxu0
    %756 = vmatprep.mubr.f32.mxu0 0.0
    %v757 = vand.u32 %v144, 4294901760
    %v758 = vsub.f32 %v144, %v757
    %759 = vmatmul.mubr.f32.gmra.mxu0 %v758
    %v760 = vpop.f32.mrf.mxu0
    %v761 = vadd.f32 %v564, %v760
    %v762 = vpop.f32.mrf.mxu0
    %763 = vmatprep.mubr.f32.mxu0 0.0
    %v764 = vand.u32 %v145, 4294901760
    %v765 = vsub.f32 %v145, %v764
    %766 = vmatmul.mubr.f32.gmra.mxu0 %v765
    %v767 = vpop.f32.mrf.mxu0
    %v768 = vadd.f32 %v570, %v767
    %v769 = vpop.f32.mrf.mxu0
    %770 = vmatprep.mubr.f32.mxu0 0.0
    %v771 = vand.u32 %v146, 4294901760
    %v772 = vsub.f32 %v146, %v771
    %773 = vmatmul.mubr.f32.gmra.mxu0 %v772
    %v774 = vpop.f32.mrf.mxu0
    %v775 = vadd.f32 %v576, %v774
    %v776 = vpop.f32.mrf.mxu0
    %777 = vmatprep.mubr.f32.mxu0 0.0
    %v778 = vand.u32 %v147, 4294901760
    %v779 = vsub.f32 %v147, %v778
    %780 = vmatmul.mubr.f32.gmra.mxu0 %v779
    %v781 = vpop.f32.mrf.mxu0
    %v782 = vadd.f32 %v582, %v781
    %v783 = vpop.f32.mrf.mxu0
    %784 = vmatprep.mubr.f32.mxu0 0.0
    %v785 = vand.u32 %v148, 4294901760
    %v786 = vsub.f32 %v148, %v785
    %787 = vmatmul.mubr.f32.gmra.mxu0 %v786
    %v788 = vpop.f32.mrf.mxu0
    %v789 = vadd.f32 %v588, %v788
    %v790 = vpop.f32.mrf.mxu0
    %791 = vmatprep.mubr.f32.mxu0 0.0
    %v792 = vand.u32 %v149, 4294901760
    %v793 = vsub.f32 %v149, %v792
    %794 = vmatmul.mubr.f32.gmra.mxu0 %v793
    %v795 = vpop.f32.mrf.mxu0
    %v796 = vadd.f32 %v594, %v795
    %v797 = vpop.f32.mrf.mxu0
    %798 = vmatprep.mubr.f32.mxu0 0.0
    %v799 = vand.u32 %v150, 4294901760
    %v800 = vsub.f32 %v150, %v799
    %801 = vmatmul.mubr.f32.gmra.mxu0 %v800
    %v802 = vpop.f32.mrf.mxu0
    %v803 = vadd.f32 %v600, %v802
    %v804 = vpop.f32.mrf.mxu0
    %805 = vmatprep.mubr.f32.mxu0 0.0
    %v806 = vand.u32 %v151, 4294901760
    %v807 = vsub.f32 %v151, %v806
    %808 = vmatmul.mubr.f32.gmra.mxu0 %v807
    %v809 = vpop.f32.mrf.mxu0
    %v810 = vadd.f32 %v606, %v809
    %v811 = vpop.f32.mrf.mxu0
    %812 = vmatprep.mubr.f32.mxu0 0.0
    %v813 = vand.u32 %v152, 4294901760
    %v814 = vsub.f32 %v152, %v813
    %815 = vmatmul.mubr.f32.gmra.mxu0 %v814
    %v816 = vpop.f32.mrf.mxu0
    %v817 = vadd.f32 %v612, %v816
    %v818 = vpop.f32.mrf.mxu0
    %819 = vmatprep.mubr.f32.mxu0 0.0
    %v820 = vand.u32 %v153, 4294901760
    %v821 = vsub.f32 %v153, %v820
    %822 = vmatmul.mubr.f32.gmra.mxu0 %v821
    %v823 = vpop.f32.mrf.mxu0
    %v824 = vadd.f32 %v618, %v823
    %v825 = vpop.f32.mrf.mxu0
    %826 = vmatprep.mubr.f32.mxu0 0.0
    %v827 = vand.u32 %v154, 4294901760
    %v828 = vsub.f32 %v154, %v827
    %829 = vmatmul.mubr.f32.gmra.mxu0 %v828
    %v830 = vpop.f32.mrf.mxu0
    %v831 = vadd.f32 %v624, %v830
    %v832 = vpop.f32.mrf.mxu0
    %833 = vmatprep.mubr.f32.mxu0 0.0
    %v834 = vand.u32 %v155, 4294901760
    %v835 = vsub.f32 %v155, %v834
    %836 = vmatmul.mubr.f32.gmra.mxu0 %v835
    %v837 = vpop.f32.mrf.mxu0
    %v838 = vadd.f32 %v630, %v837
    %v839 = vpop.f32.mrf.mxu0
    %840 = vmatprep.mubr.f32.mxu0 0.0
    %v841 = vand.u32 %v156, 4294901760
    %v842 = vsub.f32 %v156, %v841
    %843 = vmatmul.mubr.f32.gmra.mxu0 %v842
    %v844 = vpop.f32.mrf.mxu0
    %v845 = vadd.f32 %v636, %v844
    %v846 = vpop.f32.mrf.mxu0
    %847 = vdwg.mxu0
    %848 = vmatprep.subr.mxu0 0.0
    %v849 = vand.u32 %v124, 4294901760
    %850 = vmatpush1.msra.mxu0 %v849
    %851 = vmatprep.subr.mxu0 0.0
    %v852 = vand.u32 %v123, 4294901760
    %853 = vmatpush1.msra.mxu0 %v852
    %854 = vmatprep.subr.mxu0 0.0
    %v855 = vand.u32 %v122, 4294901760
    %856 = vmatpush1.msra.mxu0 %v855
    %857 = vmatprep.subr.mxu0 0.0
    %v858 = vand.u32 %v121, 4294901760
    %859 = vmatpush1.msra.mxu0 %v858
    %860 = vmatprep.subr.mxu0 0.0
    %v861 = vand.u32 %v120, 4294901760
    %862 = vmatpush1.msra.mxu0 %v861
    %863 = vmatprep.subr.mxu0 0.0
    %v864 = vand.u32 %v119, 4294901760
    %865 = vmatpush1.msra.mxu0 %v864
    %866 = vmatprep.subr.mxu0 0.0
    %v867 = vand.u32 %v118, 4294901760
    %868 = vmatpush1.msra.mxu0 %v867
    %869 = vmatprep.subr.mxu0 0.0
    %v870 = vand.u32 %v117, 4294901760
    %871 = vmatpush1.msra.mxu0 %v870
    %872 = vmatprep.subr.mxu0 0.0
    %v873 = vand.u32 %v116, 4294901760
    %874 = vmatpush1.msra.mxu0 %v873
    %875 = vmatprep.subr.mxu0 0.0
    %v876 = vand.u32 %v115, 4294901760
    %877 = vmatpush1.msra.mxu0 %v876
    %878 = vmatprep.subr.mxu0 0.0
    %v879 = vand.u32 %v114, 4294901760
    %880 = vmatpush1.msra.mxu0 %v879
    %881 = vmatprep.subr.mxu0 0.0
    %v882 = vand.u32 %v113, 4294901760
    %883 = vmatpush1.msra.mxu0 %v882
    %884 = vmatprep.subr.mxu0 0.0
    %v885 = vand.u32 %v112, 4294901760
    %886 = vmatpush1.msra.mxu0 %v885
    %887 = vmatprep.subr.mxu0 0.0
    %v888 = vand.u32 %v111, 4294901760
    %889 = vmatpush1.msra.mxu0 %v888
    %890 = vmatprep.subr.mxu0 0.0
    %v891 = vand.u32 %v110, 4294901760
    %892 = vmatpush1.msra.mxu0 %v891
    %893 = vmatprep.subr.mxu0 0.0
    %v894 = vand.u32 %v109, 4294901760
    %895 = vmatpush1.msra.mxu0 %v894
    %896 = vmatprep.subr.mxu0 0.0
    %897 = vmatpush2.msra.mxu0 0.0
    %898 = vmatprep.subr.mxu0 0.0
    %899 = vmatpush2.msra.mxu0 0.0
    %900 = vmatprep.subr.mxu0 0.0
    %901 = vmatpush2.msra.mxu0 0.0
    %902 = vmatprep.subr.mxu0 0.0
    %903 = vmatpush2.msra.mxu0 0.0
    %904 = vmatprep.subr.mxu0 0.0
    %905 = vmatpush2.msra.mxu0 0.0
    %906 = vmatprep.subr.mxu0 0.0
    %907 = vmatpush2.msra.mxu0 0.0
    %908 = vmatprep.subr.mxu0 0.0
    %909 = vmatpush2.msra.mxu0 0.0
    %910 = vmatprep.subr.mxu0 0.0
    %911 = vmatpush2.msra.mxu0 0.0
    %912 = vmatprep.subr.mxu0 0.0
    %913 = vmatpush2.msra.mxu0 0.0
    %914 = vmatprep.subr.mxu0 0.0
    %915 = vmatpush2.msra.mxu0 0.0
    %916 = vmatprep.subr.mxu0 0.0
    %917 = vmatpush2.msra.mxu0 0.0
    %918 = vmatprep.subr.mxu0 0.0
    %919 = vmatpush2.msra.mxu0 0.0
    %920 = vmatprep.subr.mxu0 0.0
    %921 = vmatpush2.msra.mxu0 0.0
    %922 = vmatprep.subr.mxu0 0.0
    %923 = vmatpush2.msra.mxu0 0.0
    %924 = vmatprep.subr.mxu0 0.0
    %925 = vmatpush2.msra.mxu0 0.0
    %926 = vmatprep.subr.mxu0 0.0
    %927 = vmatpush2.msra.mxu0 0.0
    %928 = vmatprep.mubr.f32.mxu0 0.0
    %v929 = vand.u32 %v141, 4294901760
    %v930 = vsub.f32 %v141, %v929
    %v931 = vand.u32 %v930, 4294901760
    %932 = vmatmul.mubr.f32.gmra.mxu0 %v931
    %v933 = vpop.f32.mrf.mxu0
    %v934 = vadd.f32 %v740, %v933
    %v935 = vpop.f32.mrf.mxu0
    %936 = vmatprep.mubr.f32.mxu0 0.0
    %v937 = vand.u32 %v142, 4294901760
    %v938 = vsub.f32 %v142, %v937
    %v939 = vand.u32 %v938, 4294901760
    %940 = vmatmul.mubr.f32.gmra.mxu0 %v939
    %v941 = vpop.f32.mrf.mxu0
    %v942 = vadd.f32 %v747, %v941
    %v943 = vpop.f32.mrf.mxu0
    %944 = vmatprep.mubr.f32.mxu0 0.0
    %v945 = vand.u32 %v143, 4294901760
    %v946 = vsub.f32 %v143, %v945
    %v947 = vand.u32 %v946, 4294901760
    %948 = vmatmul.mubr.f32.gmra.mxu0 %v947
    %v949 = vpop.f32.mrf.mxu0
    %v950 = vadd.f32 %v754, %v949
    %v951 = vpop.f32.mrf.mxu0
    %952 = vmatprep.mubr.f32.mxu0 0.0
    %v953 = vand.u32 %v144, 4294901760
    %v954 = vsub.f32 %v144, %v953
    %v955 = vand.u32 %v954, 4294901760
    %956 = vmatmul.mubr.f32.gmra.mxu0 %v955
    %v957 = vpop.f32.mrf.mxu0
    %v958 = vadd.f32 %v761, %v957
    %v959 = vpop.f32.mrf.mxu0
    %960 = vmatprep.mubr.f32.mxu0 0.0
    %v961 = vand.u32 %v145, 4294901760
    %v962 = vsub.f32 %v145, %v961
    %v963 = vand.u32 %v962, 4294901760
    %964 = vmatmul.mubr.f32.gmra.mxu0 %v963
    %v965 = vpop.f32.mrf.mxu0
    %v966 = vadd.f32 %v768, %v965
    %v967 = vpop.f32.mrf.mxu0
    %968 = vmatprep.mubr.f32.mxu0 0.0
    %v969 = vand.u32 %v146, 4294901760
    %v970 = vsub.f32 %v146, %v969
    %v971 = vand.u32 %v970, 4294901760
    %972 = vmatmul.mubr.f32.gmra.mxu0 %v971
    %v973 = vpop.f32.mrf.mxu0
    %v974 = vadd.f32 %v775, %v973
    %v975 = vpop.f32.mrf.mxu0
    %976 = vmatprep.mubr.f32.mxu0 0.0
    %v977 = vand.u32 %v147, 4294901760
    %v978 = vsub.f32 %v147, %v977
    %v979 = vand.u32 %v978, 4294901760
    %980 = vmatmul.mubr.f32.gmra.mxu0 %v979
    %v981 = vpop.f32.mrf.mxu0
    %v982 = vadd.f32 %v782, %v981
    %v983 = vpop.f32.mrf.mxu0
    %984 = vmatprep.mubr.f32.mxu0 0.0
    %v985 = vand.u32 %v148, 4294901760
    %v986 = vsub.f32 %v148, %v985
    %v987 = vand.u32 %v986, 4294901760
    %988 = vmatmul.mubr.f32.gmra.mxu0 %v987
    %v989 = vpop.f32.mrf.mxu0
    %v990 = vadd.f32 %v789, %v989
    %v991 = vpop.f32.mrf.mxu0
    %992 = vmatprep.mubr.f32.mxu0 0.0
    %v993 = vand.u32 %v149, 4294901760
    %v994 = vsub.f32 %v149, %v993
    %v995 = vand.u32 %v994, 4294901760
    %996 = vmatmul.mubr.f32.gmra.mxu0 %v995
    %v997 = vpop.f32.mrf.mxu0
    %v998 = vadd.f32 %v796, %v997
    %v999 = vpop.f32.mrf.mxu0
    %1000 = vmatprep.mubr.f32.mxu0 0.0
    %v1001 = vand.u32 %v150, 4294901760
    %v1002 = vsub.f32 %v150, %v1001
    %v1003 = vand.u32 %v1002, 4294901760
    %1004 = vmatmul.mubr.f32.gmra.mxu0 %v1003
    %v1005 = vpop.f32.mrf.mxu0
    %v1006 = vadd.f32 %v803, %v1005
    %v1007 = vpop.f32.mrf.mxu0
    %1008 = vmatprep.mubr.f32.mxu0 0.0
    %v1009 = vand.u32 %v151, 4294901760
    %v1010 = vsub.f32 %v151, %v1009
    %v1011 = vand.u32 %v1010, 4294901760
    %1012 = vmatmul.mubr.f32.gmra.mxu0 %v1011
    %v1013 = vpop.f32.mrf.mxu0
    %v1014 = vadd.f32 %v810, %v1013
    %v1015 = vpop.f32.mrf.mxu0
    %1016 = vmatprep.mubr.f32.mxu0 0.0
    %v1017 = vand.u32 %v152, 4294901760
    %v1018 = vsub.f32 %v152, %v1017
    %v1019 = vand.u32 %v1018, 4294901760
    %1020 = vmatmul.mubr.f32.gmra.mxu0 %v1019
    %v1021 = vpop.f32.mrf.mxu0
    %v1022 = vadd.f32 %v817, %v1021
    %v1023 = vpop.f32.mrf.mxu0
    %1024 = vmatprep.mubr.f32.mxu0 0.0
    %v1025 = vand.u32 %v153, 4294901760
    %v1026 = vsub.f32 %v153, %v1025
    %v1027 = vand.u32 %v1026, 4294901760
    %1028 = vmatmul.mubr.f32.gmra.mxu0 %v1027
    %v1029 = vpop.f32.mrf.mxu0
    %v1030 = vadd.f32 %v824, %v1029
    %v1031 = vpop.f32.mrf.mxu0
    %1032 = vmatprep.mubr.f32.mxu0 0.0
    %v1033 = vand.u32 %v154, 4294901760
    %v1034 = vsub.f32 %v154, %v1033
    %v1035 = vand.u32 %v1034, 4294901760
    %1036 = vmatmul.mubr.f32.gmra.mxu0 %v1035
    %v1037 = vpop.f32.mrf.mxu0
    %v1038 = vadd.f32 %v831, %v1037
    %v1039 = vpop.f32.mrf.mxu0
    %1040 = vmatprep.mubr.f32.mxu0 0.0
    %v1041 = vand.u32 %v155, 4294901760
    %v1042 = vsub.f32 %v155, %v1041
    %v1043 = vand.u32 %v1042, 4294901760
    %1044 = vmatmul.mubr.f32.gmra.mxu0 %v1043
    %v1045 = vpop.f32.mrf.mxu0
    %v1046 = vadd.f32 %v838, %v1045
    %v1047 = vpop.f32.mrf.mxu0
    %1048 = vmatprep.mubr.f32.mxu0 0.0
    %v1049 = vand.u32 %v156, 4294901760
    %v1050 = vsub.f32 %v156, %v1049
    %v1051 = vand.u32 %v1050, 4294901760
    %1052 = vmatmul.mubr.f32.gmra.mxu0 %v1051
    %v1053 = vpop.f32.mrf.mxu0
    %v1054 = vadd.f32 %v845, %v1053
    %v1055 = vpop.f32.mrf.mxu0
    %1056 = vdwg.mxu0
    %1057 = vmatprep.subr.mxu0 0.0
    %v1058 = vand.u32 %v124, 4294901760
    %v1059 = vsub.f32 %v124, %v1058
    %v1060 = vand.u32 %v1059, 4294901760
    %1061 = vmatpush1.msra.mxu0 %v1060
    %1062 = vmatprep.subr.mxu0 0.0
    %v1063 = vand.u32 %v123, 4294901760
    %v1064 = vsub.f32 %v123, %v1063
    %v1065 = vand.u32 %v1064, 4294901760
    %1066 = vmatpush1.msra.mxu0 %v1065
    %1067 = vmatprep.subr.mxu0 0.0
    %v1068 = vand.u32 %v122, 4294901760
    %v1069 = vsub.f32 %v122, %v1068
    %v1070 = vand.u32 %v1069, 4294901760
    %1071 = vmatpush1.msra.mxu0 %v1070
    %1072 = vmatprep.subr.mxu0 0.0
    %v1073 = vand.u32 %v121, 4294901760
    %v1074 = vsub.f32 %v121, %v1073
    %v1075 = vand.u32 %v1074, 4294901760
    %1076 = vmatpush1.msra.mxu0 %v1075
    %1077 = vmatprep.subr.mxu0 0.0
    %v1078 = vand.u32 %v120, 4294901760
    %v1079 = vsub.f32 %v120, %v1078
    %v1080 = vand.u32 %v1079, 4294901760
    %1081 = vmatpush1.msra.mxu0 %v1080
    %1082 = vmatprep.subr.mxu0 0.0
    %v1083 = vand.u32 %v119, 4294901760
    %v1084 = vsub.f32 %v119, %v1083
    %v1085 = vand.u32 %v1084, 4294901760
    %1086 = vmatpush1.msra.mxu0 %v1085
    %1087 = vmatprep.subr.mxu0 0.0
    %v1088 = vand.u32 %v118, 4294901760
    %v1089 = vsub.f32 %v118, %v1088
    %v1090 = vand.u32 %v1089, 4294901760
    %1091 = vmatpush1.msra.mxu0 %v1090
    %1092 = vmatprep.subr.mxu0 0.0
    %v1093 = vand.u32 %v117, 4294901760
    %v1094 = vsub.f32 %v117, %v1093
    %v1095 = vand.u32 %v1094, 4294901760
    %1096 = vmatpush1.msra.mxu0 %v1095
    %1097 = vmatprep.subr.mxu0 0.0
    %v1098 = vand.u32 %v116, 4294901760
    %v1099 = vsub.f32 %v116, %v1098
    %v1100 = vand.u32 %v1099, 4294901760
    %1101 = vmatpush1.msra.mxu0 %v1100
    %1102 = vmatprep.subr.mxu0 0.0
    %v1103 = vand.u32 %v115, 4294901760
    %v1104 = vsub.f32 %v115, %v1103
    %v1105 = vand.u32 %v1104, 4294901760
    %1106 = vmatpush1.msra.mxu0 %v1105
    %1107 = vmatprep.subr.mxu0 0.0
    %v1108 = vand.u32 %v114, 4294901760
    %v1109 = vsub.f32 %v114, %v1108
    %v1110 = vand.u32 %v1109, 4294901760
    %1111 = vmatpush1.msra.mxu0 %v1110
    %1112 = vmatprep.subr.mxu0 0.0
    %v1113 = vand.u32 %v113, 4294901760
    %v1114 = vsub.f32 %v113, %v1113
    %v1115 = vand.u32 %v1114, 4294901760
    %1116 = vmatpush1.msra.mxu0 %v1115
    %1117 = vmatprep.subr.mxu0 0.0
    %v1118 = vand.u32 %v112, 4294901760
    %v1119 = vsub.f32 %v112, %v1118
    %v1120 = vand.u32 %v1119, 4294901760
    %1121 = vmatpush1.msra.mxu0 %v1120
    %1122 = vmatprep.subr.mxu0 0.0
    %v1123 = vand.u32 %v111, 4294901760
    %v1124 = vsub.f32 %v111, %v1123
    %v1125 = vand.u32 %v1124, 4294901760
    %1126 = vmatpush1.msra.mxu0 %v1125
    %1127 = vmatprep.subr.mxu0 0.0
    %v1128 = vand.u32 %v110, 4294901760
    %v1129 = vsub.f32 %v110, %v1128
    %v1130 = vand.u32 %v1129, 4294901760
    %1131 = vmatpush1.msra.mxu0 %v1130
    %1132 = vmatprep.subr.mxu0 0.0
    %v1133 = vand.u32 %v109, 4294901760
    %v1134 = vsub.f32 %v109, %v1133
    %v1135 = vand.u32 %v1134, 4294901760
    %1136 = vmatpush1.msra.mxu0 %v1135
    %1137 = vmatprep.subr.mxu0 0.0
    %1138 = vmatpush2.msra.mxu0 0.0
    %1139 = vmatprep.subr.mxu0 0.0
    %1140 = vmatpush2.msra.mxu0 0.0
    %1141 = vmatprep.subr.mxu0 0.0
    %1142 = vmatpush2.msra.mxu0 0.0
    %1143 = vmatprep.subr.mxu0 0.0
    %1144 = vmatpush2.msra.mxu0 0.0
    %1145 = vmatprep.subr.mxu0 0.0
    %1146 = vmatpush2.msra.mxu0 0.0
    %1147 = vmatprep.subr.mxu0 0.0
    %1148 = vmatpush2.msra.mxu0 0.0
    %1149 = vmatprep.subr.mxu0 0.0
    %1150 = vmatpush2.msra.mxu0 0.0
    %1151 = vmatprep.subr.mxu0 0.0
    %1152 = vmatpush2.msra.mxu0 0.0
    %1153 = vmatprep.subr.mxu0 0.0
    %1154 = vmatpush2.msra.mxu0 0.0
    %1155 = vmatprep.subr.mxu0 0.0
    %1156 = vmatpush2.msra.mxu0 0.0
    %1157 = vmatprep.subr.mxu0 0.0
    %1158 = vmatpush2.msra.mxu0 0.0
    %1159 = vmatprep.subr.mxu0 0.0
    %1160 = vmatpush2.msra.mxu0 0.0
    %1161 = vmatprep.subr.mxu0 0.0
    %1162 = vmatpush2.msra.mxu0 0.0
    %1163 = vmatprep.subr.mxu0 0.0
    %1164 = vmatpush2.msra.mxu0 0.0
    %1165 = vmatprep.subr.mxu0 0.0
    %1166 = vmatpush2.msra.mxu0 0.0
    %1167 = vmatprep.subr.mxu0 0.0
    %1168 = vmatpush2.msra.mxu0 0.0
    %1169 = vmatprep.mubr.f32.mxu0 0.0
    %v1170 = vand.u32 %v141, 4294901760
    %1171 = vmatmul.mubr.f32.gmra.mxu0 %v1170
    %v1172 = vpop.f32.mrf.mxu0
    %v1173 = vadd.f32 %v934, %v1172
    %v1174 = vpop.f32.mrf.mxu0
    %1175 = vmatprep.mubr.f32.mxu0 0.0
    %v1176 = vand.u32 %v142, 4294901760
    %1177 = vmatmul.mubr.f32.gmra.mxu0 %v1176
    %v1178 = vpop.f32.mrf.mxu0
    %v1179 = vadd.f32 %v942, %v1178
    %v1180 = vpop.f32.mrf.mxu0
    %1181 = vmatprep.mubr.f32.mxu0 0.0
    %v1182 = vand.u32 %v143, 4294901760
    %1183 = vmatmul.mubr.f32.gmra.mxu0 %v1182
    %v1184 = vpop.f32.mrf.mxu0
    %v1185 = vadd.f32 %v950, %v1184
    %v1186 = vpop.f32.mrf.mxu0
    %1187 = vmatprep.mubr.f32.mxu0 0.0
    %v1188 = vand.u32 %v144, 4294901760
    %1189 = vmatmul.mubr.f32.gmra.mxu0 %v1188
    %v1190 = vpop.f32.mrf.mxu0
    %v1191 = vadd.f32 %v958, %v1190
    %v1192 = vpop.f32.mrf.mxu0
    %1193 = vmatprep.mubr.f32.mxu0 0.0
    %v1194 = vand.u32 %v145, 4294901760
    %1195 = vmatmul.mubr.f32.gmra.mxu0 %v1194
    %v1196 = vpop.f32.mrf.mxu0
    %v1197 = vadd.f32 %v966, %v1196
    %v1198 = vpop.f32.mrf.mxu0
    %1199 = vmatprep.mubr.f32.mxu0 0.0
    %v1200 = vand.u32 %v146, 4294901760
    %1201 = vmatmul.mubr.f32.gmra.mxu0 %v1200
    %v1202 = vpop.f32.mrf.mxu0
    %v1203 = vadd.f32 %v974, %v1202
    %v1204 = vpop.f32.mrf.mxu0
    %1205 = vmatprep.mubr.f32.mxu0 0.0
    %v1206 = vand.u32 %v147, 4294901760
    %1207 = vmatmul.mubr.f32.gmra.mxu0 %v1206
    %v1208 = vpop.f32.mrf.mxu0
    %v1209 = vadd.f32 %v982, %v1208
    %v1210 = vpop.f32.mrf.mxu0
    %1211 = vmatprep.mubr.f32.mxu0 0.0
    %v1212 = vand.u32 %v148, 4294901760
    %1213 = vmatmul.mubr.f32.gmra.mxu0 %v1212
    %v1214 = vpop.f32.mrf.mxu0
    %v1215 = vadd.f32 %v990, %v1214
    %v1216 = vpop.f32.mrf.mxu0
    %1217 = vmatprep.mubr.f32.mxu0 0.0
    %v1218 = vand.u32 %v149, 4294901760
    %1219 = vmatmul.mubr.f32.gmra.mxu0 %v1218
    %v1220 = vpop.f32.mrf.mxu0
    %v1221 = vadd.f32 %v998, %v1220
    %v1222 = vpop.f32.mrf.mxu0
    %1223 = vmatprep.mubr.f32.mxu0 0.0
    %v1224 = vand.u32 %v150, 4294901760
    %1225 = vmatmul.mubr.f32.gmra.mxu0 %v1224
    %v1226 = vpop.f32.mrf.mxu0
    %v1227 = vadd.f32 %v1006, %v1226
    %v1228 = vpop.f32.mrf.mxu0
    %1229 = vmatprep.mubr.f32.mxu0 0.0
    %v1230 = vand.u32 %v151, 4294901760
    %1231 = vmatmul.mubr.f32.gmra.mxu0 %v1230
    %v1232 = vpop.f32.mrf.mxu0
    %v1233 = vadd.f32 %v1014, %v1232
    %v1234 = vpop.f32.mrf.mxu0
    %1235 = vmatprep.mubr.f32.mxu0 0.0
    %v1236 = vand.u32 %v152, 4294901760
    %1237 = vmatmul.mubr.f32.gmra.mxu0 %v1236
    %v1238 = vpop.f32.mrf.mxu0
    %v1239 = vadd.f32 %v1022, %v1238
    %v1240 = vpop.f32.mrf.mxu0
    %1241 = vmatprep.mubr.f32.mxu0 0.0
    %v1242 = vand.u32 %v153, 4294901760
    %1243 = vmatmul.mubr.f32.gmra.mxu0 %v1242
    %v1244 = vpop.f32.mrf.mxu0
    %v1245 = vadd.f32 %v1030, %v1244
    %v1246 = vpop.f32.mrf.mxu0
    %1247 = vmatprep.mubr.f32.mxu0 0.0
    %v1248 = vand.u32 %v154, 4294901760
    %1249 = vmatmul.mubr.f32.gmra.mxu0 %v1248
    %v1250 = vpop.f32.mrf.mxu0
    %v1251 = vadd.f32 %v1038, %v1250
    %v1252 = vpop.f32.mrf.mxu0
    %1253 = vmatprep.mubr.f32.mxu0 0.0
    %v1254 = vand.u32 %v155, 4294901760
    %1255 = vmatmul.mubr.f32.gmra.mxu0 %v1254
    %v1256 = vpop.f32.mrf.mxu0
    %v1257 = vadd.f32 %v1046, %v1256
    %v1258 = vpop.f32.mrf.mxu0
    %1259 = vmatprep.mubr.f32.mxu0 0.0
    %v1260 = vand.u32 %v156, 4294901760
    %1261 = vmatmul.mubr.f32.gmra.mxu0 %v1260
    %v1262 = vpop.f32.mrf.mxu0
    %v1263 = vadd.f32 %v1054, %v1262
    %v1264 = vpop.f32.mrf.mxu0
    %1265 = vdwg.mxu0
    %1266 = vmatprep.subr.mxu0 0.0
    %v1267 = vand.u32 %v124, 4294901760
    %1268 = vmatpush1.msra.mxu0 %v1267
    %1269 = vmatprep.subr.mxu0 0.0
    %v1270 = vand.u32 %v123, 4294901760
    %1271 = vmatpush1.msra.mxu0 %v1270
    %1272 = vmatprep.subr.mxu0 0.0
    %v1273 = vand.u32 %v122, 4294901760
    %1274 = vmatpush1.msra.mxu0 %v1273
    %1275 = vmatprep.subr.mxu0 0.0
    %v1276 = vand.u32 %v121, 4294901760
    %1277 = vmatpush1.msra.mxu0 %v1276
    %1278 = vmatprep.subr.mxu0 0.0
    %v1279 = vand.u32 %v120, 4294901760
    %1280 = vmatpush1.msra.mxu0 %v1279
    %1281 = vmatprep.subr.mxu0 0.0
    %v1282 = vand.u32 %v119, 4294901760
    %1283 = vmatpush1.msra.mxu0 %v1282
    %1284 = vmatprep.subr.mxu0 0.0
    %v1285 = vand.u32 %v118, 4294901760
    %1286 = vmatpush1.msra.mxu0 %v1285
    %1287 = vmatprep.subr.mxu0 0.0
    %v1288 = vand.u32 %v117, 4294901760
    %1289 = vmatpush1.msra.mxu0 %v1288
    %1290 = vmatprep.subr.mxu0 0.0
    %v1291 = vand.u32 %v116, 4294901760
    %1292 = vmatpush1.msra.mxu0 %v1291
    %1293 = vmatprep.subr.mxu0 0.0
    %v1294 = vand.u32 %v115, 4294901760
    %1295 = vmatpush1.msra.mxu0 %v1294
    %1296 = vmatprep.subr.mxu0 0.0
    %v1297 = vand.u32 %v114, 4294901760
    %1298 = vmatpush1.msra.mxu0 %v1297
    %1299 = vmatprep.subr.mxu0 0.0
    %v1300 = vand.u32 %v113, 4294901760
    %1301 = vmatpush1.msra.mxu0 %v1300
    %1302 = vmatprep.subr.mxu0 0.0
    %v1303 = vand.u32 %v112, 4294901760
    %1304 = vmatpush1.msra.mxu0 %v1303
    %1305 = vmatprep.subr.mxu0 0.0
    %v1306 = vand.u32 %v111, 4294901760
    %1307 = vmatpush1.msra.mxu0 %v1306
    %1308 = vmatprep.subr.mxu0 0.0
    %v1309 = vand.u32 %v110, 4294901760
    %1310 = vmatpush1.msra.mxu0 %v1309
    %1311 = vmatprep.subr.mxu0 0.0
    %v1312 = vand.u32 %v109, 4294901760
    %1313 = vmatpush1.msra.mxu0 %v1312
    %1314 = vmatprep.subr.mxu0 0.0
    %1315 = vmatpush2.msra.mxu0 0.0
    %1316 = vmatprep.subr.mxu0 0.0
    %1317 = vmatpush2.msra.mxu0 0.0
    %1318 = vmatprep.subr.mxu0 0.0
    %1319 = vmatpush2.msra.mxu0 0.0
    %1320 = vmatprep.subr.mxu0 0.0
    %1321 = vmatpush2.msra.mxu0 0.0
    %1322 = vmatprep.subr.mxu0 0.0
    %1323 = vmatpush2.msra.mxu0 0.0
    %1324 = vmatprep.subr.mxu0 0.0
    %1325 = vmatpush2.msra.mxu0 0.0
    %1326 = vmatprep.subr.mxu0 0.0
    %1327 = vmatpush2.msra.mxu0 0.0
    %1328 = vmatprep.subr.mxu0 0.0
    %1329 = vmatpush2.msra.mxu0 0.0
    %1330 = vmatprep.subr.mxu0 0.0
    %1331 = vmatpush2.msra.mxu0 0.0
    %1332 = vmatprep.subr.mxu0 0.0
    %1333 = vmatpush2.msra.mxu0 0.0
    %1334 = vmatprep.subr.mxu0 0.0
    %1335 = vmatpush2.msra.mxu0 0.0
    %1336 = vmatprep.subr.mxu0 0.0
    %1337 = vmatpush2.msra.mxu0 0.0
    %1338 = vmatprep.subr.mxu0 0.0
    %1339 = vmatpush2.msra.mxu0 0.0
    %1340 = vmatprep.subr.mxu0 0.0
    %1341 = vmatpush2.msra.mxu0 0.0
    %1342 = vmatprep.subr.mxu0 0.0
    %1343 = vmatpush2.msra.mxu0 0.0
    %1344 = vmatprep.subr.mxu0 0.0
    %1345 = vmatpush2.msra.mxu0 0.0
    %1346 = vmatprep.mubr.f32.mxu0 0.0
    %v1347 = vand.u32 %v141, 4294901760
    %1348 = vmatmul.mubr.f32.gmra.mxu0 %v1347
    %v1349 = vpop.f32.mrf.mxu0
    %v1350 = vadd.f32 %v1173, %v1349
    %v1351 = vpop.f32.mrf.mxu0
    %1352 = vmatprep.mubr.f32.mxu0 0.0
    %v1353 = vand.u32 %v142, 4294901760
    %1354 = vmatmul.mubr.f32.gmra.mxu0 %v1353
    %v1355 = vpop.f32.mrf.mxu0
    %v1356 = vadd.f32 %v1179, %v1355
    %v1357 = vpop.f32.mrf.mxu0
    %1358 = vmatprep.mubr.f32.mxu0 0.0
    %v1359 = vand.u32 %v143, 4294901760
    %1360 = vmatmul.mubr.f32.gmra.mxu0 %v1359
    %v1361 = vpop.f32.mrf.mxu0
    %v1362 = vadd.f32 %v1185, %v1361
    %v1363 = vpop.f32.mrf.mxu0
    %1364 = vmatprep.mubr.f32.mxu0 0.0
    %v1365 = vand.u32 %v144, 4294901760
    %1366 = vmatmul.mubr.f32.gmra.mxu0 %v1365
    %v1367 = vpop.f32.mrf.mxu0
    %v1368 = vadd.f32 %v1191, %v1367
    %v1369 = vpop.f32.mrf.mxu0
    %1370 = vmatprep.mubr.f32.mxu0 0.0
    %v1371 = vand.u32 %v145, 4294901760
    %1372 = vmatmul.mubr.f32.gmra.mxu0 %v1371
    %v1373 = vpop.f32.mrf.mxu0
    %v1374 = vadd.f32 %v1197, %v1373
    %v1375 = vpop.f32.mrf.mxu0
    %1376 = vmatprep.mubr.f32.mxu0 0.0
    %v1377 = vand.u32 %v146, 4294901760
    %1378 = vmatmul.mubr.f32.gmra.mxu0 %v1377
    %v1379 = vpop.f32.mrf.mxu0
    %v1380 = vadd.f32 %v1203, %v1379
    %v1381 = vpop.f32.mrf.mxu0
    %1382 = vmatprep.mubr.f32.mxu0 0.0
    %v1383 = vand.u32 %v147, 4294901760
    %1384 = vmatmul.mubr.f32.gmra.mxu0 %v1383
    %v1385 = vpop.f32.mrf.mxu0
    %v1386 = vadd.f32 %v1209, %v1385
    %v1387 = vpop.f32.mrf.mxu0
    %1388 = vmatprep.mubr.f32.mxu0 0.0
    %v1389 = vand.u32 %v148, 4294901760
    %1390 = vmatmul.mubr.f32.gmra.mxu0 %v1389
    %v1391 = vpop.f32.mrf.mxu0
    %v1392 = vadd.f32 %v1215, %v1391
    %v1393 = vpop.f32.mrf.mxu0
    %1394 = vmatprep.mubr.f32.mxu0 0.0
    %v1395 = vand.u32 %v149, 4294901760
    %1396 = vmatmul.mubr.f32.gmra.mxu0 %v1395
    %v1397 = vpop.f32.mrf.mxu0
    %v1398 = vadd.f32 %v1221, %v1397
    %v1399 = vpop.f32.mrf.mxu0
    %1400 = vmatprep.mubr.f32.mxu0 0.0
    %v1401 = vand.u32 %v150, 4294901760
    %1402 = vmatmul.mubr.f32.gmra.mxu0 %v1401
    %v1403 = vpop.f32.mrf.mxu0
    %v1404 = vadd.f32 %v1227, %v1403
    %v1405 = vpop.f32.mrf.mxu0
    %1406 = vmatprep.mubr.f32.mxu0 0.0
    %v1407 = vand.u32 %v151, 4294901760
    %1408 = vmatmul.mubr.f32.gmra.mxu0 %v1407
    %v1409 = vpop.f32.mrf.mxu0
    %v1410 = vadd.f32 %v1233, %v1409
    %v1411 = vpop.f32.mrf.mxu0
    %1412 = vmatprep.mubr.f32.mxu0 0.0
    %v1413 = vand.u32 %v152, 4294901760
    %1414 = vmatmul.mubr.f32.gmra.mxu0 %v1413
    %v1415 = vpop.f32.mrf.mxu0
    %v1416 = vadd.f32 %v1239, %v1415
    %v1417 = vpop.f32.mrf.mxu0
    %1418 = vmatprep.mubr.f32.mxu0 0.0
    %v1419 = vand.u32 %v153, 4294901760
    %1420 = vmatmul.mubr.f32.gmra.mxu0 %v1419
    %v1421 = vpop.f32.mrf.mxu0
    %v1422 = vadd.f32 %v1245, %v1421
    %v1423 = vpop.f32.mrf.mxu0
    %1424 = vmatprep.mubr.f32.mxu0 0.0
    %v1425 = vand.u32 %v154, 4294901760
    %1426 = vmatmul.mubr.f32.gmra.mxu0 %v1425
    %v1427 = vpop.f32.mrf.mxu0
    %v1428 = vadd.f32 %v1251, %v1427
    %v1429 = vpop.f32.mrf.mxu0
    %1430 = vmatprep.mubr.f32.mxu0 0.0
    %v1431 = vand.u32 %v155, 4294901760
    %1432 = vmatmul.mubr.f32.gmra.mxu0 %v1431
    %v1433 = vpop.f32.mrf.mxu0
    %v1434 = vadd.f32 %v1257, %v1433
    %v1435 = vpop.f32.mrf.mxu0
    %1436 = vmatprep.mubr.f32.mxu0 0.0
    %v1437 = vand.u32 %v156, 4294901760
    %1438 = vmatmul.mubr.f32.gmra.mxu0 %v1437
    %v1439 = vpop.f32.mrf.mxu0
    %v1440 = vadd.f32 %v1263, %v1439
    %v1441 = vpop.f32.mrf.mxu0
    %1442 = vdwg.mxu0
    %1443 = vst [vmem:[#allocation7] sm:$0xff] %v1350
    %1444 = vst [vmem:[#allocation7 + $0x8] sm:$0xff] %v1356
    %1445 = vst [vmem:[#allocation7 + $0x10] sm:$0xff] %v1362
    %1446 = vst [vmem:[#allocation7 + $0x18] sm:$0xff] %v1368
    %1447 = vst [vmem:[#allocation7 + $0x20] sm:$0xff] %v1374
    %1448 = vst [vmem:[#allocation7 + $0x28] sm:$0xff] %v1380
    %1449 = vst [vmem:[#allocation7 + $0x30] sm:$0xff] %v1386
    %1450 = vst [vmem:[#allocation7 + $0x38] sm:$0xff] %v1392
    %1451 = vst [vmem:[#allocation7 + $0x40] sm:$0xff] %v1398
    %1452 = vst [vmem:[#allocation7 + $0x48] sm:$0xff] %v1404
    %1453 = vst [vmem:[#allocation7 + $0x50] sm:$0xff] %v1410
    %1454 = vst [vmem:[#allocation7 + $0x58] sm:$0xff] %v1416
    %1455 = vst [vmem:[#allocation7 + $0x60] sm:$0xff] %v1422
    %1456 = vst [vmem:[#allocation7 + $0x68] sm:$0xff] %v1428
    %1457 = vst [vmem:[#allocation7 + $0x70] sm:$0xff] %v1434
    %1458 = vst [vmem:[#allocation7 + $0x78] sm:$0xff] %v1440
    // Predicated region
    $region18: #{tpu_custom_call.1} parent=1 // pred_check
      _
    $region19: #{tpu_custom_call.1} parent=1 // pred_check_branch
      %1460 = sbr.rel (0) target = $region21
    $region20: #{tpu_custom_call.1} parent=1 // pred_region
      %s1462 = ssub.s32 2048, 896
      %1463 = vsyncadd [#allocation4], %s1462
      %s1464 = sshll.u32 [#allocation7], 4
      %s1465 = int_to_ptr.vmem [resolvable:$true] %s1464
      %1470 = dma.vmem_to_hbm [thread:$0]  %s1465, 896, %s2, [#allocation4], 128, 128, 8
    $region21: #{tpu_custom_call.1} parent=1 // pred_fallthru
      _
    // Predicated region
    $region22: #{tpu_custom_call.1} parent=1 // pred_check
      _
    $region23: #{tpu_custom_call.1} parent=1 // pred_check_branch
      %1472 = sbr.rel (0) target = $region25
    $region24: #{tpu_custom_call.1} parent=1 // pred_region
      %1473 = dma.done [#allocation4], 2048
    $region25: #{tpu_custom_call.1} parent=1 // pred_fallthru
      _
    %1474 = vsyncpa [#allocation3], 1
    %1475 = vsyncpa [#allocation6], 1
    %1476 = vsyncpa [#allocation4], 1

</llo_original>
